<compile_context>
chip_gen: v6e
topology: v6e:2x2x1
jax: 0.10.0
libtpu: 0.0.40
codegen_flags: <defaults>
</compile_context>

<pallas_src>
import jax
import jax.numpy as jnp
from jax.experimental import pallas as pl
from jax.experimental.pallas import tpu as pltpu


def _round_up(n, m):
    return ((n + m - 1) // m) * m


def _cdiv(a, b):
    return (a + b - 1) // b


def _choose_batch_tiling(B):
    """Pick (bm, Bp): batch tile and padded batch.

    - batch <= 256: one tile (serving path), minimal (8-row) padding.
    - otherwise: even number of steps (>=2, so v7x megacore splits evenly),
      tile <= 1024 rows, multiple of 16 (bf16 sublane pairing), padding kept
      to < one step of 16 rows.
    """
    Bp8 = _round_up(B, 8)
    if Bp8 <= 256:
        return Bp8, Bp8
    n_steps = 2 * _cdiv(Bp8, 2048)          # even, >= 2, keeps bm <= 1024
    bm = _round_up(_cdiv(Bp8, n_steps), 16)
    return bm, bm * n_steps


def _choose_out_tile(Op):
    """Output-feature tile: whole thing if small, else largest divisor of Op
    that is a multiple of 128 and <= 2048 (128 always divides Op)."""
    if Op <= 2048:
        return Op
    for bn in range(2048, 127, -128):
        if Op % bn == 0:
            return bn
    return 128


def decoder_kernel(x_ref, w1_ref, b1_ref, w2_ref, b2_ref, o_ref):
    # Layer 1: (bm, zsize) @ (zsize, Hp); bf16 operands, f32 accumulation.
    h = jnp.dot(x_ref[...].astype(jnp.bfloat16), w1_ref[...],
                preferred_element_type=jnp.float32)
    h = jax.nn.sigmoid(h + b1_ref[...])                 # bias + sigmoid in f32
    # Layer 2: (bm, Hp) @ (Hp, bn); bf16 operands, f32 accumulation.
    y = jnp.dot(h.astype(jnp.bfloat16), w2_ref[...],
                preferred_element_type=jnp.float32)
    o_ref[...] = jax.nn.sigmoid(y + b2_ref[...]).astype(o_ref.dtype)


def decoder_forward(x, w1, b1, w2, b2, *, bm=None, bn=None, out_dtype=None):
    """Tybalt VAE Decoder forward.

    x  : (B, zsize)           (row-major, batch on sublanes)
    w1 : (hidden, zsize)      (PyTorch nn.Linear layout)
    b1 : (hidden,)
    w2 : (output_size, hidden)
    b2 : (output_size,)

    out_dtype: defaults to x.dtype (f32).  Pass jnp.bfloat16 on v6e to halve
    output writeback bytes (sigmoid output is in [0,1]).
    """
    B, zsize = x.shape
    H = w1.shape[0]
    O = w2.shape[0]
    out_dtype = x.dtype if out_dtype is None else out_dtype

    # Lane-pad hidden and output feature dims to multiples of 128.
    Hp = _round_up(H, 128)
    Op = _round_up(O, 128)

    # Batch tiling (even >=2-step grid for large batches, single tile small).
    if bm is None:
        bm, Bp = _choose_batch_tiling(B)
    else:
        bm = max(8, _round_up(bm, 8))
        Bp = _round_up(B, bm)

    # Output-feature tiling (only matters for the real ~5000-gene output).
    if bn is None:
        bn = _choose_out_tile(Op)
    bn = min(Op, _round_up(bn, 128))
    if Op % bn != 0:
        bn = _choose_out_tile(Op)
    nj = Op // bn

    # Pre-transpose + zero-pad weights; cast to bf16. Biases stay f32 (2-D
    # for lane broadcast).  No zsize padding (it only inflates x DMA bytes,
    # MXU push count is unchanged).
    w1_t = jnp.zeros((zsize, Hp), jnp.bfloat16).at[:, :H].set(
        w1.T.astype(jnp.bfloat16))
    b1_p = jnp.zeros((1, Hp), jnp.float32).at[:, :H].set(
        b1.astype(jnp.float32))
    w2_t = jnp.zeros((Hp, Op), jnp.bfloat16).at[:H, :O].set(
        w2.T.astype(jnp.bfloat16))
    b2_p = jnp.zeros((1, Op), jnp.float32).at[:, :O].set(
        b2.astype(jnp.float32))

    x_p = x if Bp == B else jnp.pad(x, ((0, Bp - B), (0, 0)))

    out_itemsize = jnp.dtype(out_dtype).itemsize
    # Explicit scoped-VMEM budget (footprint + 25% headroom, clamped to the
    # v7x 64 MiB physical ceiling).
    vmem_bytes = int(
        2 * bm * zsize * 4                       # x tiles (double-buffered)
        + zsize * Hp * 2 + Hp * 4                # resident W1^T + b1
        + 2 * (Hp * bn * 2 + bn * 4)             # W2^T / b2 tiles
        + 2 * bm * bn * out_itemsize             # output tiles
        + bm * Hp * (4 + 2)                      # in-kernel hidden (f32 + bf16)
        + bm * bn * 4                            # layer-2 f32 accumulator
    )
    vmem_limit = min(64 * 1024 * 1024,
                     max(32 * 1024 * 1024, vmem_bytes * 5 // 4))

    cost = pl.CostEstimate(
        flops=2 * Bp * (zsize * Hp * nj + Hp * Op),
        transcendentals=Bp * (Hp * nj + Op),
        bytes_accessed=(Bp * zsize * 4                 # x (f32)
                        + (zsize * Hp + Hp * Op) * 2   # bf16 weights
                        + (Hp + Op) * 4                # f32 biases
                        + Bp * Op * out_itemsize),     # output
    )

    out = pl.pallas_call(
        decoder_kernel,
        out_shape=jax.ShapeDtypeStruct((Bp, Op), out_dtype),
        grid_spec=pltpu.PrefetchScalarGridSpec(
            num_scalar_prefetch=0,
            grid=(Bp // bm, nj),
            in_specs=[
                pl.BlockSpec((bm, zsize), lambda i, j: (i, 0)),  # x tile
                pl.BlockSpec((zsize, Hp), lambda i, j: (0, 0)),  # W1^T (resident)
                pl.BlockSpec((1, Hp), lambda i, j: (0, 0)),      # b1
                pl.BlockSpec((Hp, bn), lambda i, j: (0, j)),     # W2^T tile
                pl.BlockSpec((1, bn), lambda i, j: (0, j)),      # b2 tile
            ],
            out_specs=pl.BlockSpec((bm, bn), lambda i, j: (i, j)),
        ),
        compiler_params=pltpu.CompilerParams(
            # Batch tiles shard across TensorCores on v7x (even step count);
            # output-feature axis is a plain loop.
            dimension_semantics=("parallel", "arbitrary"),
            vmem_limit_bytes=vmem_limit,
        ),
        cost_estimate=cost,
    )(x_p, w1_t, b1_p, w2_t, b2_p)

    # Strip padding only if any was introduced (avoids an extra HBM pass over
    # the output in the common no-padding case).
    if Bp != B or Op != O:
        out = out[:B, :O]
    return out


def _init_linear(key, fan_in, fan_out, dtype=jnp.float32):
    # Mirrors torch.nn.Linear default init: U(-1/sqrt(fan_in), 1/sqrt(fan_in))
    kw, kb = jax.random.split(key)
    bound = 1.0 / jnp.sqrt(fan_in)
    w = jax.random.uniform(kw, (fan_out, fan_in), dtype, -bound, bound)
    b = jax.random.uniform(kb, (fan_out,), dtype, -bound, bound)
    return w, b


if __name__ == "__main__":
    # Shapes consistent with the module: zsize=32, hidden=1000 (fixed by the
    # module), output_size=256; small batch for the serving path.
    B, zsize, hidden, output_size = 8, 32, 1000, 256

    key = jax.random.PRNGKey(0)
    kx, k1, k2, kx2 = jax.random.split(key, 4)

    x = jax.random.normal(kx, (B, zsize), jnp.float32)
    w1, b1 = _init_linear(k1, zsize, hidden)          # (1000, 32), (1000,)
    w2, b2 = _init_linear(k2, hidden, output_size)    # (256, 1000), (256,)

    # Reference in plain f32 JAX (same math as the PyTorch module). Kernel
    # uses bf16 matmul operands with f32 accumulation -> loosened tolerance.
    def ref(xv):
        h = jax.nn.sigmoid(xv @ w1.T + b1)
        return jax.nn.sigmoid(h @ w2.T + b2)

    # 1) Tiny-batch single-tile path.
    out = jax.block_until_ready(decoder_forward(x, w1, b1, w2, b2))
    assert out.shape == (B, output_size)
    assert jnp.allclose(out, ref(x), atol=2e-2, rtol=2e-2), (
        float(jnp.max(jnp.abs(out - ref(x)))))

    # 2) Multi-step (even, >=2 grid steps) path used at larger batch.
    B2 = 320
    x2 = jax.random.normal(kx2, (B2, zsize), jnp.float32)
    out2 = jax.block_until_ready(decoder_forward(x2, w1, b1, w2, b2))
    assert out2.shape == (B2, output_size)
    assert jnp.allclose(out2, ref(x2), atol=2e-2, rtol=2e-2), (
        float(jnp.max(jnp.abs(out2 - ref(x2)))))

    print("KERNEL_OK")
</pallas_src>

<mosaic_0001>
module attributes {stable_mosaic.version = 11 : i64} {
  func.func @decoder_kernel(%arg0: i32, %arg1: i32, %arg2: memref<8x32xf32, #tpu.memory_space<vmem>>, %arg3: memref<32x1024xbf16, #tpu.memory_space<vmem>>, %arg4: memref<1x1024xf32, #tpu.memory_space<vmem>>, %arg5: memref<1024x256xbf16, #tpu.memory_space<vmem>>, %arg6: memref<1x256xf32, #tpu.memory_space<vmem>>, %arg7: memref<8x256xf32, #tpu.memory_space<vmem>>) attributes {dimension_semantics = [#tpu.dimension_semantics<parallel>, #tpu.dimension_semantics<arbitrary>], iteration_bounds = array<i64: 1, 1>, scalar_prefetch = 0 : i64, scratch_operands = 0 : i64, tpu.core_type = #tpu.core_type<tc>, window_params = [{transform_indices = @transform_0, window_bounds = array<i64: 8, 32>}, {pipeline_mode = #tpu.pipeline_mode<synchronous>, transform_indices = @transform_1, window_bounds = array<i64: 32, 1024>}, {pipeline_mode = #tpu.pipeline_mode<synchronous>, transform_indices = @transform_2, window_bounds = array<i64: 1, 1024>}, {transform_indices = @transform_3, window_bounds = array<i64: 1024, 256>}, {transform_indices = @transform_4, window_bounds = array<i64: 1, 256>}, {transform_indices = @transform_5, window_bounds = array<i64: 8, 256>}]} {
    %c0 = arith.constant 0 : index
    %c0_0 = arith.constant 0 : index
    %0 = vector.load %arg2[%c0, %c0_0] : memref<8x32xf32, #tpu.memory_space<vmem>>, vector<8x32xf32>
    %1 = arith.truncf %0 : vector<8x32xf32> to vector<8x32xbf16>
    %c0_1 = arith.constant 0 : index
    %c0_2 = arith.constant 0 : index
    %2 = vector.load %arg3[%c0_1, %c0_2] : memref<32x1024xbf16, #tpu.memory_space<vmem>>, vector<32x1024xbf16>
    %cst = arith.constant dense<0.000000e+00> : vector<8x1024xf32>
    %3 = tpu.matmul %1, %2, %cst {dimension_numbers = #tpu.dot_dimension_numbers<[1], [0], [0], [1], [0, 0, 1, 1], [], []>} : vector<8x32xbf16>, vector<32x1024xbf16>, vector<8x1024xf32> -> vector<8x1024xf32>
    %c0_3 = arith.constant 0 : index
    %c0_4 = arith.constant 0 : index
    %4 = vector.load %arg4[%c0_3, %c0_4] : memref<1x1024xf32, #tpu.memory_space<vmem>>, vector<1x1024xf32>
    %5 = vector.broadcast %4 : vector<1x1024xf32> to vector<8x1024xf32>
    %6 = arith.addf %3, %5 : vector<8x1024xf32>
    %7 = arith.negf %6 : vector<8x1024xf32>
    %8 = math.exp %7 : vector<8x1024xf32>
    %cst_5 = arith.constant 1.000000e+00 : f32
    %9 = vector.broadcast %cst_5 : f32 to vector<8x1024xf32>
    %10 = arith.addf %9, %8 : vector<8x1024xf32>
    %11 = arith.divf %9, %10 : vector<8x1024xf32>
    %12 = arith.truncf %11 : vector<8x1024xf32> to vector<8x1024xbf16>
    %c0_6 = arith.constant 0 : index
    %c0_7 = arith.constant 0 : index
    %13 = vector.load %arg5[%c0_6, %c0_7] : memref<1024x256xbf16, #tpu.memory_space<vmem>>, vector<1024x256xbf16>
    %cst_8 = arith.constant dense<0.000000e+00> : vector<8x256xf32>
    %14 = tpu.matmul %12, %13, %cst_8 {dimension_numbers = #tpu.dot_dimension_numbers<[1], [0], [0], [1], [0, 0, 1, 1], [], []>} : vector<8x1024xbf16>, vector<1024x256xbf16>, vector<8x256xf32> -> vector<8x256xf32>
    %c0_9 = arith.constant 0 : index
    %c0_10 = arith.constant 0 : index
    %15 = vector.load %arg6[%c0_9, %c0_10] : memref<1x256xf32, #tpu.memory_space<vmem>>, vector<1x256xf32>
    %16 = vector.broadcast %15 : vector<1x256xf32> to vector<8x256xf32>
    %17 = arith.addf %14, %16 : vector<8x256xf32>
    %18 = arith.negf %17 : vector<8x256xf32>
    %19 = math.exp %18 : vector<8x256xf32>
    %cst_11 = arith.constant 1.000000e+00 : f32
    %20 = vector.broadcast %cst_11 : f32 to vector<8x256xf32>
    %21 = arith.addf %20, %19 : vector<8x256xf32>
    %22 = arith.divf %20, %21 : vector<8x256xf32>
    %c0_12 = arith.constant 0 : index
    %c0_13 = arith.constant 0 : index
    %23 = vector.load %arg7[%c0_12, %c0_13] : memref<8x256xf32, #tpu.memory_space<vmem>>, vector<8x256xf32>
    tpu.vector_store %arg7[%c0_12, %c0_13], %22 {strides = array<i32>} : memref<8x256xf32, #tpu.memory_space<vmem>>, vector<8x256xf32>,
    return
  }
  func.func @transform_0(%arg0: i32, %arg1: i32) -> (i32, i32) {
    %c0_i32 = arith.constant 0 : i32
    %c0_i32_0 = arith.constant 0 : i32
    return %arg0, %c0_i32 : i32, i32
  }
  func.func @transform_1(%arg0: i32, %arg1: i32) -> (i32, i32) {
    %c0_i32 = arith.constant 0 : i32
    %c0_i32_0 = arith.constant 0 : i32
    %c0_i32_1 = arith.constant 0 : i32
    return %c0_i32, %c0_i32_0 : i32, i32
  }
  func.func @transform_2(%arg0: i32, %arg1: i32) -> (i32, i32) {
    %c0_i32 = arith.constant 0 : i32
    %c0_i32_0 = arith.constant 0 : i32
    %c0_i32_1 = arith.constant 0 : i32
    return %c0_i32, %c0_i32_0 : i32, i32
  }
  func.func @transform_3(%arg0: i32, %arg1: i32) -> (i32, i32) {
    %c0_i32 = arith.constant 0 : i32
    %c0_i32_0 = arith.constant 0 : i32
    return %c0_i32, %arg1 : i32, i32
  }
  func.func @transform_4(%arg0: i32, %arg1: i32) -> (i32, i32) {
    %c0_i32 = arith.constant 0 : i32
    %c0_i32_0 = arith.constant 0 : i32
    return %c0_i32, %arg1 : i32, i32
  }
  func.func @transform_5(%arg0: i32, %arg1: i32) -> (i32, i32) {
    %c0_i32 = arith.constant 0 : i32
    return %arg0, %arg1 : i32, i32
  }
}

</mosaic_0001>

<llo_original>
// kernel: tpu_custom_call.1
$region0: #{tpu_custom_call.1}
  #allocation0 [shape = 'u32[]', space=smem, size = 0x4, offset = 0x4, fixed_abs, tag = 'smem constant byte address 0x4 - core index']
  #allocation1 [shape = 'u32[144,128]{1,0:T(1,128)}', space=vmem, size = 0x12000, scoped, tag = 'internal scratch']
  %s0 = inlined_call_operand.hbm [shape: f32[8,32], index: 0, kind: input, shape index: {}]
  %s1 = inlined_call_operand.hbm [shape: bf16[32,1024], index: 1, kind: input, shape index: {}]
  %s2 = inlined_call_operand.hbm [shape: f32[1,1024], index: 2, kind: input, shape index: {}]
  %s3 = inlined_call_operand.hbm [shape: bf16[1024,256], index: 3, kind: input, shape index: {}]
  %s4 = inlined_call_operand.vmem [shape: f32[1,256], index: 4, kind: input, shape index: {}]
  %s5 = inlined_call_operand.hbm [shape: f32[8,256], index: 5, kind: output, shape index: {}]
  %s6 = sld [smem:[#allocation0]]
  $region46: #{tpu_custom_call.1} parent=0
    _
  %s8 = ssub.s32 1, %s6
  %s9 = scalar_select 0, %s8, %s6
  $region1: #{tpu_custom_call.1} parent=0
    #allocation2 [shape = 'u8[4096]{0}', space=vmem, size = 0x1000, scoped, tag = 'input window, operand 0, single buffered']
    #allocation3 [shape = 's32[1]{0}', space=sflag, size = 0x4, scoped, tag = 'scoped memory for tpu_custom_call.1']
    #allocation4 [shape = 's32[1]{0}', space=sflag, size = 0x4, scoped, tag = 'scoped memory for tpu_custom_call.1']
    #allocation5 [shape = 'u8[65536]{0}', space=vmem, size = 0x10000, scoped, tag = 'input window, operand 1, single buffered']
    #allocation6 [shape = 's32[1]{0}', space=sflag, size = 0x4, scoped, tag = 'scoped memory for tpu_custom_call.1']
    #allocation7 [shape = 'u8[4096]{0}', space=vmem, size = 0x1000, scoped, tag = 'input window, operand 2, single buffered']
    #allocation8 [shape = 'u8[524288]{0}', space=vmem, size = 0x80000, scoped, tag = 'input window, operand 3, single buffered']
    #allocation9 [shape = 's32[1]{0}', space=sflag, size = 0x4, scoped, tag = 'scoped memory for tpu_custom_call.1']
    #allocation10 [shape = 'u8[8192]{0}', space=vmem, size = 0x2000, scoped, tag = 'output window, operand 0, single buffered']
    %10 = vsyncpa [#allocation3], 0
    %11 = vsyncpa [#allocation6], 0
    %12 = vsyncpa [#allocation9], 0
    %13 = vsyncpa [#allocation4], 0
    // Predicated region
    $region2: #{tpu_custom_call.1} parent=1 // pred_check
      _
    $region3: #{tpu_custom_call.1} parent=1 // pred_check_branch
      %15 = sbr.rel (0) target = $region5
    $region4: #{tpu_custom_call.1} parent=1 // pred_region
      %s17 = ssub.s32 128, 128
      %18 = vsyncadd [#allocation3], %s17
      %s20 = sshll.u32 [#allocation2], 4
      %s21 = int_to_ptr.vmem [resolvable:$true] %s20
      %23 = dma.hbm_to_vmem [thread:$0]  %s0, 128, %s21, [#allocation3]
    $region5: #{tpu_custom_call.1} parent=1 // pred_fallthru
      _
    // Predicated region
    $region6: #{tpu_custom_call.1} parent=1 // pred_check
      _
    $region7: #{tpu_custom_call.1} parent=1 // pred_check_branch
      %25 = sbr.rel (0) target = $region9
    $region8: #{tpu_custom_call.1} parent=1 // pred_region
      %s27 = ssub.s32 2048, 2048
      %28 = vsyncadd [#allocation6], %s27
      %s29 = sshll.u32 [#allocation5], 4
      %s30 = int_to_ptr.vmem [resolvable:$true] %s29
      %35 = dma.hbm_to_vmem [thread:$0]  %s1, 2048, %s30, [#allocation6], 512, 512, 32
    $region9: #{tpu_custom_call.1} parent=1 // pred_fallthru
      _
    // Predicated region
    $region10: #{tpu_custom_call.1} parent=1 // pred_check
      _
    $region11: #{tpu_custom_call.1} parent=1 // pred_check_branch
      %37 = sbr.rel (0) target = $region13
    $region12: #{tpu_custom_call.1} parent=1 // pred_region
      %s39 = ssub.s32 128, 128
      %40 = vsyncadd [#allocation6], %s39
      %s42 = sshll.u32 [#allocation7], 4
      %s43 = int_to_ptr.vmem [resolvable:$true] %s42
      %45 = dma.hbm_to_vmem [thread:$0]  %s2, 128, %s43, [#allocation6]
    $region13: #{tpu_custom_call.1} parent=1 // pred_fallthru
      _
    // Predicated region
    $region14: #{tpu_custom_call.1} parent=1 // pred_check
      _
    $region15: #{tpu_custom_call.1} parent=1 // pred_check_branch
      %47 = sbr.rel (0) target = $region17
    $region16: #{tpu_custom_call.1} parent=1 // pred_region
      %s49 = ssub.s32 16384, 16384
      %50 = vsyncadd [#allocation9], %s49
      %s51 = sshll.u32 [#allocation8], 4
      %s52 = int_to_ptr.vmem [resolvable:$true] %s51
      %57 = dma.hbm_to_vmem [thread:$0]  %s3, 16384, %s52, [#allocation9], 128, 128, 8
    $region17: #{tpu_custom_call.1} parent=1 // pred_fallthru
      _
    // Predicated region
    $region18: #{tpu_custom_call.1} parent=1 // pred_check
      _
    $region19: #{tpu_custom_call.1} parent=1 // pred_check_branch
      %59 = sbr.rel (0) target = $region21
    $region20: #{tpu_custom_call.1} parent=1 // pred_region
      _
    $region21: #{tpu_custom_call.1} parent=1 // pred_fallthru
      _
    // Predicated region
    $region22: #{tpu_custom_call.1} parent=1 // pred_check
      _
    $region23: #{tpu_custom_call.1} parent=1 // pred_check_branch
      %61 = sbr.rel (0) target = $region25
    $region24: #{tpu_custom_call.1} parent=1 // pred_region
      %62 = dma.done [#allocation3], 128
    $region25: #{tpu_custom_call.1} parent=1 // pred_fallthru
      _
    // Predicated region
    $region26: #{tpu_custom_call.1} parent=1 // pred_check
      _
    $region27: #{tpu_custom_call.1} parent=1 // pred_check_branch
      %64 = sbr.rel (0) target = $region29
    $region28: #{tpu_custom_call.1} parent=1 // pred_region
      %65 = dma.done [#allocation6], 2048
    $region29: #{tpu_custom_call.1} parent=1 // pred_fallthru
      _
    // Predicated region
    $region30: #{tpu_custom_call.1} parent=1 // pred_check
      _
    $region31: #{tpu_custom_call.1} parent=1 // pred_check_branch
      %67 = sbr.rel (0) target = $region33
    $region32: #{tpu_custom_call.1} parent=1 // pred_region
      %68 = dma.done [#allocation6], 128
    $region33: #{tpu_custom_call.1} parent=1 // pred_fallthru
      _
    // Predicated region
    $region34: #{tpu_custom_call.1} parent=1 // pred_check
      _
    $region35: #{tpu_custom_call.1} parent=1 // pred_check_branch
      %70 = sbr.rel (0) target = $region37
    $region36: #{tpu_custom_call.1} parent=1 // pred_region
      %71 = dma.done [#allocation9], 16384
    $region37: #{tpu_custom_call.1} parent=1 // pred_fallthru
      _
    %v73 = vld [vmem:[#allocation2] sm:$0xff]
    %v74 = vpack.c.bf16 %v73, %v73
    %v75 = vld [vmem:[#allocation5] sm:$0xff]
    %v76 = vld [vmem:[#allocation5 + $0x8] sm:$0xff]
    %v77 = vld [vmem:[#allocation5 + $0x10] sm:$0xff]
    %v78 = vld [vmem:[#allocation5 + $0x18] sm:$0xff]
    %v79 = vld [vmem:[#allocation5 + $0x20] sm:$0xff]
    %v80 = vld [vmem:[#allocation5 + $0x28] sm:$0xff]
    %v81 = vld [vmem:[#allocation5 + $0x30] sm:$0xff]
    %v82 = vld [vmem:[#allocation5 + $0x38] sm:$0xff]
    %v83 = vld [vmem:[#allocation5 + $0x40] sm:$0xff]
    %v84 = vld [vmem:[#allocation5 + $0x48] sm:$0xff]
    %v85 = vld [vmem:[#allocation5 + $0x50] sm:$0xff]
    %v86 = vld [vmem:[#allocation5 + $0x58] sm:$0xff]
    %v87 = vld [vmem:[#allocation5 + $0x60] sm:$0xff]
    %v88 = vld [vmem:[#allocation5 + $0x68] sm:$0xff]
    %v89 = vld [vmem:[#allocation5 + $0x70] sm:$0xff]
    %v90 = vld [vmem:[#allocation5 + $0x78] sm:$0xff]
    %v91 = vld [vmem:[#allocation7] sm:$0xff]
    %v93 = vlaneseq
    %v94 = vshrl.u32 %v93, 7
    %v95 = vsub.s32 0, %v94
    %v96 = vrot.slane %v91, %v95
    %v97 = vlaneseq
    %v98 = vshrl.u32 %v97, 7
    %v99 = vsub.s32 1, %v98
    %v100 = vrot.slane %v91, %v99
    %v101 = vlaneseq
    %v102 = vshrl.u32 %v101, 7
    %v103 = vsub.s32 2, %v102
    %v104 = vrot.slane %v91, %v103
    %v105 = vlaneseq
    %v106 = vshrl.u32 %v105, 7
    %v107 = vsub.s32 3, %v106
    %v108 = vrot.slane %v91, %v107
    %v109 = vlaneseq
    %v110 = vshrl.u32 %v109, 7
    %v111 = vsub.s32 4, %v110
    %v112 = vrot.slane %v91, %v111
    %v113 = vlaneseq
    %v114 = vshrl.u32 %v113, 7
    %v115 = vsub.s32 5, %v114
    %v116 = vrot.slane %v91, %v115
    %v117 = vlaneseq
    %v118 = vshrl.u32 %v117, 7
    %v119 = vsub.s32 6, %v118
    %v120 = vrot.slane %v91, %v119
    %v121 = vlaneseq
    %v122 = vshrl.u32 %v121, 7
    %v123 = vsub.s32 7, %v122
    %v124 = vrot.slane %v91, %v123
    %v149 = vunpack.c.l.b16 %v75
    %v150 = vunpack.c.h.b16 %v75
    %v151 = vunpack.c.l.b16 %v76
    %v152 = vunpack.c.h.b16 %v76
    %v153 = vunpack.c.l.b16 %v77
    %v154 = vunpack.c.h.b16 %v77
    %v155 = vunpack.c.l.b16 %v78
    %v156 = vunpack.c.h.b16 %v78
    %v157 = vunpack.c.l.b16 %v79
    %v158 = vunpack.c.h.b16 %v79
    %v159 = vunpack.c.l.b16 %v80
    %v160 = vunpack.c.h.b16 %v80
    %v161 = vunpack.c.l.b16 %v81
    %v162 = vunpack.c.h.b16 %v81
    %v163 = vunpack.c.l.b16 %v82
    %v164 = vunpack.c.h.b16 %v82
    %v165 = vunpack.c.l.b16 %v83
    %v166 = vunpack.c.h.b16 %v83
    %v167 = vunpack.c.l.b16 %v84
    %v168 = vunpack.c.h.b16 %v84
    %v169 = vunpack.c.l.b16 %v85
    %v170 = vunpack.c.h.b16 %v85
    %v171 = vunpack.c.l.b16 %v86
    %v172 = vunpack.c.h.b16 %v86
    %v173 = vunpack.c.l.b16 %v87
    %v174 = vunpack.c.h.b16 %v87
    %v175 = vunpack.c.l.b16 %v88
    %v176 = vunpack.c.h.b16 %v88
    %v177 = vunpack.c.l.b16 %v89
    %v178 = vunpack.c.h.b16 %v89
    %v179 = vunpack.c.l.b16 %v90
    %v180 = vunpack.c.h.b16 %v90
    %v181 = vpack.c.b16 %v157, %v149
    %v182 = vpack.c.b16 %v158, %v150
    %v183 = vpack.c.b16 %v159, %v151
    %v184 = vpack.c.b16 %v160, %v152
    %v185 = vpack.c.b16 %v161, %v153
    %v186 = vpack.c.b16 %v162, %v154
    %v187 = vpack.c.b16 %v163, %v155
    %v188 = vpack.c.b16 %v164, %v156
    %v189 = vpack.c.b16 %v173, %v165
    %v190 = vpack.c.b16 %v174, %v166
    %v191 = vpack.c.b16 %v175, %v167
    %v192 = vpack.c.b16 %v176, %v168
    %v193 = vpack.c.b16 %v177, %v169
    %v194 = vpack.c.b16 %v178, %v170
    %v195 = vpack.c.b16 %v179, %v171
    %v196 = vpack.c.b16 %v180, %v172
    %vm213 = vcmask 261120
    %v215 = vsel %vm213, %v74, 0
    %217 = vmatprep.subr.bf16.mxu0 0
    %218 = vmatpush1.bf16.msra.mxu0 0
    %219 = vmatprep.subr.bf16.mxu0 0
    %220 = vmatpush1.bf16.msra.mxu0 0
    %221 = vmatprep.subr.bf16.mxu0 0
    %222 = vmatpush1.bf16.msra.mxu0 0
    %223 = vmatprep.subr.bf16.mxu0 0
    %224 = vmatpush1.bf16.msra.mxu0 0
    %225 = vmatprep.subr.bf16.mxu0 0
    %226 = vmatpush1.bf16.msra.mxu0 0
    %227 = vmatprep.subr.bf16.mxu0 0
    %228 = vmatpush1.bf16.msra.mxu0 0
    %229 = vmatprep.subr.bf16.mxu0 %v190
    %230 = vmatpush1.bf16.msra.mxu0 %v189
    %231 = vmatprep.subr.bf16.mxu0 %v182
    %232 = vmatpush1.bf16.msra.mxu0 %v181
    %233 = vmatprep.subr.bf16.mxu0 0
    %234 = vmatpush2.bf16.msra.mxu0 0
    %235 = vmatprep.subr.bf16.mxu0 0
    %236 = vmatpush2.bf16.msra.mxu0 0
    %237 = vmatprep.subr.bf16.mxu0 0
    %238 = vmatpush2.bf16.msra.mxu0 0
    %239 = vmatprep.subr.bf16.mxu0 0
    %240 = vmatpush2.bf16.msra.mxu0 0
    %241 = vmatprep.subr.bf16.mxu0 0
    %242 = vmatpush2.bf16.msra.mxu0 0
    %243 = vmatprep.subr.bf16.mxu0 0
    %244 = vmatpush2.bf16.msra.mxu0 0
    %245 = vmatprep.subr.bf16.mxu0 0
    %246 = vmatpush2.bf16.msra.mxu0 0
    %247 = vmatprep.subr.bf16.mxu0 0
    %248 = vmatpush2.bf16.msra.mxu0 0
    %249 = vmatprep.mubr.bf16.mxu0 0
    %250 = vmatmul.mubr.bf16.gmra.mxu0 %v215
    %v251 = vpop.f32.mrf.mxu0
    %v252 = vadd.f32 %v96, %v251
    %v253 = vpop.f32.mrf.mxu0
    %v254 = vadd.f32 %v100, %v253
    %v255 = vpop.f32.mrf.mxu0
    %v256 = vpop.f32.mrf.mxu0
    %257 = vdwg.mxu0
    %258 = vmatprep.subr.bf16.mxu0 0
    %259 = vmatpush1.bf16.msra.mxu0 0
    %260 = vmatprep.subr.bf16.mxu0 0
    %261 = vmatpush1.bf16.msra.mxu0 0
    %262 = vmatprep.subr.bf16.mxu0 0
    %263 = vmatpush1.bf16.msra.mxu0 0
    %264 = vmatprep.subr.bf16.mxu0 0
    %265 = vmatpush1.bf16.msra.mxu0 0
    %266 = vmatprep.subr.bf16.mxu0 0
    %267 = vmatpush1.bf16.msra.mxu0 0
    %268 = vmatprep.subr.bf16.mxu0 0
    %269 = vmatpush1.bf16.msra.mxu0 0
    %270 = vmatprep.subr.bf16.mxu0 %v192
    %271 = vmatpush1.bf16.msra.mxu0 %v191
    %272 = vmatprep.subr.bf16.mxu0 %v184
    %273 = vmatpush1.bf16.msra.mxu0 %v183
    %274 = vmatprep.subr.bf16.mxu0 0
    %275 = vmatpush2.bf16.msra.mxu0 0
    %276 = vmatprep.subr.bf16.mxu0 0
    %277 = vmatpush2.bf16.msra.mxu0 0
    %278 = vmatprep.subr.bf16.mxu0 0
    %279 = vmatpush2.bf16.msra.mxu0 0
    %280 = vmatprep.subr.bf16.mxu0 0
    %281 = vmatpush2.bf16.msra.mxu0 0
    %282 = vmatprep.subr.bf16.mxu0 0
    %283 = vmatpush2.bf16.msra.mxu0 0
    %284 = vmatprep.subr.bf16.mxu0 0
    %285 = vmatpush2.bf16.msra.mxu0 0
    %286 = vmatprep.subr.bf16.mxu0 0
    %287 = vmatpush2.bf16.msra.mxu0 0
    %288 = vmatprep.subr.bf16.mxu0 0
    %289 = vmatpush2.bf16.msra.mxu0 0
    %290 = vmatprep.mubr.bf16.mxu0 0
    %291 = vmatmul.mubr.bf16.gmra.mxu0 %v215
    %v292 = vpop.f32.mrf.mxu0
    %v293 = vadd.f32 %v104, %v292
    %v294 = vpop.f32.mrf.mxu0
    %v295 = vadd.f32 %v108, %v294
    %v296 = vpop.f32.mrf.mxu0
    %v297 = vpop.f32.mrf.mxu0
    %298 = vdwg.mxu0
    %299 = vmatprep.subr.bf16.mxu0 0
    %300 = vmatpush1.bf16.msra.mxu0 0
    %301 = vmatprep.subr.bf16.mxu0 0
    %302 = vmatpush1.bf16.msra.mxu0 0
    %303 = vmatprep.subr.bf16.mxu0 0
    %304 = vmatpush1.bf16.msra.mxu0 0
    %305 = vmatprep.subr.bf16.mxu0 0
    %306 = vmatpush1.bf16.msra.mxu0 0
    %307 = vmatprep.subr.bf16.mxu0 0
    %308 = vmatpush1.bf16.msra.mxu0 0
    %309 = vmatprep.subr.bf16.mxu0 0
    %310 = vmatpush1.bf16.msra.mxu0 0
    %311 = vmatprep.subr.bf16.mxu0 %v194
    %312 = vmatpush1.bf16.msra.mxu0 %v193
    %313 = vmatprep.subr.bf16.mxu0 %v186
    %314 = vmatpush1.bf16.msra.mxu0 %v185
    %315 = vmatprep.subr.bf16.mxu0 0
    %316 = vmatpush2.bf16.msra.mxu0 0
    %317 = vmatprep.subr.bf16.mxu0 0
    %318 = vmatpush2.bf16.msra.mxu0 0
    %319 = vmatprep.subr.bf16.mxu0 0
    %320 = vmatpush2.bf16.msra.mxu0 0
    %321 = vmatprep.subr.bf16.mxu0 0
    %322 = vmatpush2.bf16.msra.mxu0 0
    %323 = vmatprep.subr.bf16.mxu0 0
    %324 = vmatpush2.bf16.msra.mxu0 0
    %325 = vmatprep.subr.bf16.mxu0 0
    %326 = vmatpush2.bf16.msra.mxu0 0
    %327 = vmatprep.subr.bf16.mxu0 0
    %328 = vmatpush2.bf16.msra.mxu0 0
    %329 = vmatprep.subr.bf16.mxu0 0
    %330 = vmatpush2.bf16.msra.mxu0 0
    %331 = vmatprep.mubr.bf16.mxu0 0
    %332 = vmatmul.mubr.bf16.gmra.mxu0 %v215
    %v333 = vpop.f32.mrf.mxu0
    %v334 = vadd.f32 %v112, %v333
    %v335 = vpop.f32.mrf.mxu0
    %v336 = vadd.f32 %v116, %v335
    %v337 = vpop.f32.mrf.mxu0
    %v338 = vpop.f32.mrf.mxu0
    %339 = vdwg.mxu0
    %340 = vmatprep.subr.bf16.mxu0 0
    %341 = vmatpush1.bf16.msra.mxu0 0
    %342 = vmatprep.subr.bf16.mxu0 0
    %343 = vmatpush1.bf16.msra.mxu0 0
    %344 = vmatprep.subr.bf16.mxu0 0
    %345 = vmatpush1.bf16.msra.mxu0 0
    %346 = vmatprep.subr.bf16.mxu0 0
    %347 = vmatpush1.bf16.msra.mxu0 0
    %348 = vmatprep.subr.bf16.mxu0 0
    %349 = vmatpush1.bf16.msra.mxu0 0
    %350 = vmatprep.subr.bf16.mxu0 0
    %351 = vmatpush1.bf16.msra.mxu0 0
    %352 = vmatprep.subr.bf16.mxu0 %v196
    %353 = vmatpush1.bf16.msra.mxu0 %v195
    %354 = vmatprep.subr.bf16.mxu0 %v188
    %355 = vmatpush1.bf16.msra.mxu0 %v187
    %356 = vmatprep.subr.bf16.mxu0 0
    %357 = vmatpush2.bf16.msra.mxu0 0
    %358 = vmatprep.subr.bf16.mxu0 0
    %359 = vmatpush2.bf16.msra.mxu0 0
    %360 = vmatprep.subr.bf16.mxu0 0
    %361 = vmatpush2.bf16.msra.mxu0 0
    %362 = vmatprep.subr.bf16.mxu0 0
    %363 = vmatpush2.bf16.msra.mxu0 0
    %364 = vmatprep.subr.bf16.mxu0 0
    %365 = vmatpush2.bf16.msra.mxu0 0
    %366 = vmatprep.subr.bf16.mxu0 0
    %367 = vmatpush2.bf16.msra.mxu0 0
    %368 = vmatprep.subr.bf16.mxu0 0
    %369 = vmatpush2.bf16.msra.mxu0 0
    %370 = vmatprep.subr.bf16.mxu0 0
    %371 = vmatpush2.bf16.msra.mxu0 0
    %372 = vmatprep.mubr.bf16.mxu0 0
    %373 = vmatmul.mubr.bf16.gmra.mxu0 %v215
    %v374 = vpop.f32.mrf.mxu0
    %v375 = vadd.f32 %v120, %v374
    %v376 = vpop.f32.mrf.mxu0
    %v377 = vadd.f32 %v124, %v376
    %v378 = vpop.f32.mrf.mxu0
    %v379 = vpop.f32.mrf.mxu0
    %380 = vdwg.mxu0
    %v381 = vxor.u32 %v252, 2147483648
    %v382 = vxor.u32 %v254, 2147483648
    %v383 = vxor.u32 %v293, 2147483648
    %v384 = vxor.u32 %v295, 2147483648
    %v385 = vxor.u32 %v334, 2147483648
    %v386 = vxor.u32 %v336, 2147483648
    %v387 = vxor.u32 %v375, 2147483648
    %v388 = vxor.u32 %v377, 2147483648
    %v389 = vmul.f32 %v381, 1.442695
    %v390 = vpow.pop %v389
    %v391 = vmul.f32 %v382, 1.442695
    %v392 = vpow.pop %v391
    %v393 = vmul.f32 %v383, 1.442695
    %v394 = vpow.pop %v393
    %v395 = vmul.f32 %v384, 1.442695
    %v396 = vpow.pop %v395
    %v397 = vmul.f32 %v385, 1.442695
    %v398 = vpow.pop %v397
    %v399 = vmul.f32 %v386, 1.442695
    %v400 = vpow.pop %v399
    %v401 = vmul.f32 %v387, 1.442695
    %v402 = vpow.pop %v401
    %v403 = vmul.f32 %v388, 1.442695
    %v404 = vpow.pop %v403
    %v405 = vadd.f32 %v390, 1.0
    %v406 = vadd.f32 %v392, 1.0
    %v407 = vadd.f32 %v394, 1.0
    %v408 = vadd.f32 %v396, 1.0
    %v409 = vadd.f32 %v398, 1.0
    %v410 = vadd.f32 %v400, 1.0
    %v411 = vadd.f32 %v402, 1.0
    %v412 = vadd.f32 %v404, 1.0
    %v413 = vrcp.pop %v405
    %v414 = vmul.f32 1.0, %v413
    %v415 = vrcp.pop %v406
    %v416 = vmul.f32 1.0, %v415
    %v417 = vrcp.pop %v407
    %v418 = vmul.f32 1.0, %v417
    %v419 = vrcp.pop %v408
    %v420 = vmul.f32 1.0, %v419
    %v421 = vrcp.pop %v409
    %v422 = vmul.f32 1.0, %v421
    %v423 = vrcp.pop %v410
    %v424 = vmul.f32 1.0, %v423
    %v425 = vrcp.pop %v411
    %v426 = vmul.f32 1.0, %v425
    %v427 = vrcp.pop %v412
    %v428 = vmul.f32 1.0, %v427
    %v429 = vpack.c.bf16 %v414, %v414
    %v430 = vpack.c.bf16 %v416, %v416
    %v431 = vpack.c.bf16 %v418, %v418
    %v432 = vpack.c.bf16 %v420, %v420
    %v433 = vpack.c.bf16 %v422, %v422
    %v434 = vpack.c.bf16 %v424, %v424
    %v435 = vpack.c.bf16 %v426, %v426
    %v436 = vpack.c.bf16 %v428, %v428
    %v437 = vld [vmem:[#allocation8] sm:$0xff]
    %v438 = vld [vmem:[#allocation8 + $0x8] sm:$0xff]
    %v439 = vld [vmem:[#allocation8 + $0x10] sm:$0xff]
    %v440 = vld [vmem:[#allocation8 + $0x18] sm:$0xff]
    %v441 = vld [vmem:[#allocation8 + $0x20] sm:$0xff]
    %v442 = vld [vmem:[#allocation8 + $0x28] sm:$0xff]
    %v443 = vld [vmem:[#allocation8 + $0x30] sm:$0xff]
    %v444 = vld [vmem:[#allocation8 + $0x38] sm:$0xff]
    %v445 = vld [vmem:[#allocation8 + $0x40] sm:$0xff]
    %v446 = vld [vmem:[#allocation8 + $0x48] sm:$0xff]
    %v447 = vld [vmem:[#allocation8 + $0x50] sm:$0xff]
    %v448 = vld [vmem:[#allocation8 + $0x58] sm:$0xff]
    %v449 = vld [vmem:[#allocation8 + $0x60] sm:$0xff]
    %v450 = vld [vmem:[#allocation8 + $0x68] sm:$0xff]
    %v451 = vld [vmem:[#allocation8 + $0x70] sm:$0xff]
    %v452 = vld [vmem:[#allocation8 + $0x78] sm:$0xff]
    %v453 = vld [vmem:[#allocation8 + $0x80] sm:$0xff]
    %v454 = vld [vmem:[#allocation8 + $0x88] sm:$0xff]
    %v455 = vld [vmem:[#allocation8 + $0x90] sm:$0xff]
    %v456 = vld [vmem:[#allocation8 + $0x98] sm:$0xff]
    %v457 = vld [vmem:[#allocation8 + $0xa0] sm:$0xff]
    %v458 = vld [vmem:[#allocation8 + $0xa8] sm:$0xff]
    %v459 = vld [vmem:[#allocation8 + $0xb0] sm:$0xff]
    %v460 = vld [vmem:[#allocation8 + $0xb8] sm:$0xff]
    %v461 = vld [vmem:[#allocation8 + $0xc0] sm:$0xff]
    %v462 = vld [vmem:[#allocation8 + $0xc8] sm:$0xff]
    %v463 = vld [vmem:[#allocation8 + $0xd0] sm:$0xff]
    %v464 = vld [vmem:[#allocation8 + $0xd8] sm:$0xff]
    %v465 = vld [vmem:[#allocation8 + $0xe0] sm:$0xff]
    %v466 = vld [vmem:[#allocation8 + $0xe8] sm:$0xff]
    %v467 = vld [vmem:[#allocation8 + $0xf0] sm:$0xff]
    %v468 = vld [vmem:[#allocation8 + $0xf8] sm:$0xff]
    %v469 = vld [vmem:[#allocation8 + $0x100] sm:$0xff]
    %v470 = vld [vmem:[#allocation8 + $0x108] sm:$0xff]
    %v471 = vld [vmem:[#allocation8 + $0x110] sm:$0xff]
    %v472 = vld [vmem:[#allocation8 + $0x118] sm:$0xff]
    %v473 = vld [vmem:[#allocation8 + $0x120] sm:$0xff]
    %v474 = vld [vmem:[#allocation8 + $0x128] sm:$0xff]
    %v475 = vld [vmem:[#allocation8 + $0x130] sm:$0xff]
    %v476 = vld [vmem:[#allocation8 + $0x138] sm:$0xff]
    %v477 = vld [vmem:[#allocation8 + $0x140] sm:$0xff]
    %v478 = vld [vmem:[#allocation8 + $0x148] sm:$0xff]
    %v479 = vld [vmem:[#allocation8 + $0x150] sm:$0xff]
    %v480 = vld [vmem:[#allocation8 + $0x158] sm:$0xff]
    %v481 = vld [vmem:[#allocation8 + $0x160] sm:$0xff]
    %v482 = vld [vmem:[#allocation8 + $0x168] sm:$0xff]
    %v483 = vld [vmem:[#allocation8 + $0x170] sm:$0xff]
    %v484 = vld [vmem:[#allocation8 + $0x178] sm:$0xff]
    %v485 = vld [vmem:[#allocation8 + $0x180] sm:$0xff]
    %v486 = vld [vmem:[#allocation8 + $0x188] sm:$0xff]
    %v487 = vld [vmem:[#allocation8 + $0x190] sm:$0xff]
    %v488 = vld [vmem:[#allocation8 + $0x198] sm:$0xff]
    %v489 = vld [vmem:[#allocation8 + $0x1a0] sm:$0xff]
    %v490 = vld [vmem:[#allocation8 + $0x1a8] sm:$0xff]
    %v491 = vld [vmem:[#allocation8 + $0x1b0] sm:$0xff]
    %v492 = vld [vmem:[#allocation8 + $0x1b8] sm:$0xff]
    %v493 = vld [vmem:[#allocation8 + $0x1c0] sm:$0xff]
    %v494 = vld [vmem:[#allocation8 + $0x1c8] sm:$0xff]
    %v495 = vld [vmem:[#allocation8 + $0x1d0] sm:$0xff]
    %v496 = vld [vmem:[#allocation8 + $0x1d8] sm:$0xff]
    %v497 = vld [vmem:[#allocation8 + $0x1e0] sm:$0xff]
    %v498 = vld [vmem:[#allocation8 + $0x1e8] sm:$0xff]
    %v499 = vld [vmem:[#allocation8 + $0x1f0] sm:$0xff]
    %v500 = vld [vmem:[#allocation8 + $0x1f8] sm:$0xff]
    %v501 = vld [vmem:[#allocation8 + $0x200] sm:$0xff]
    %v502 = vld [vmem:[#allocation8 + $0x208] sm:$0xff]
    %v503 = vld [vmem:[#allocation8 + $0x210] sm:$0xff]
    %v504 = vld [vmem:[#allocation8 + $0x218] sm:$0xff]
    %v505 = vld [vmem:[#allocation8 + $0x220] sm:$0xff]
    %v506 = vld [vmem:[#allocation8 + $0x228] sm:$0xff]
    %v507 = vld [vmem:[#allocation8 + $0x230] sm:$0xff]
    %v508 = vld [vmem:[#allocation8 + $0x238] sm:$0xff]
    %v509 = vld [vmem:[#allocation8 + $0x240] sm:$0xff]
    %v510 = vld [vmem:[#allocation8 + $0x248] sm:$0xff]
    %v511 = vld [vmem:[#allocation8 + $0x250] sm:$0xff]
    %v512 = vld [vmem:[#allocation8 + $0x258] sm:$0xff]
    %v513 = vld [vmem:[#allocation8 + $0x260] sm:$0xff]
    %v514 = vld [vmem:[#allocation8 + $0x268] sm:$0xff]
    %v515 = vld [vmem:[#allocation8 + $0x270] sm:$0xff]
    %v516 = vld [vmem:[#allocation8 + $0x278] sm:$0xff]
    %v517 = vld [vmem:[#allocation8 + $0x280] sm:$0xff]
    %v518 = vld [vmem:[#allocation8 + $0x288] sm:$0xff]
    %v519 = vld [vmem:[#allocation8 + $0x290] sm:$0xff]
    %v520 = vld [vmem:[#allocation8 + $0x298] sm:$0xff]
    %v521 = vld [vmem:[#allocation8 + $0x2a0] sm:$0xff]
    %v522 = vld [vmem:[#allocation8 + $0x2a8] sm:$0xff]
    %v523 = vld [vmem:[#allocation8 + $0x2b0] sm:$0xff]
    %v524 = vld [vmem:[#allocation8 + $0x2b8] sm:$0xff]
    %v525 = vld [vmem:[#allocation8 + $0x2c0] sm:$0xff]
    %v526 = vld [vmem:[#allocation8 + $0x2c8] sm:$0xff]
    %v527 = vld [vmem:[#allocation8 + $0x2d0] sm:$0xff]
    %v528 = vld [vmem:[#allocation8 + $0x2d8] sm:$0xff]
    %v529 = vld [vmem:[#allocation8 + $0x2e0] sm:$0xff]
    %v530 = vld [vmem:[#allocation8 + $0x2e8] sm:$0xff]
    %v531 = vld [vmem:[#allocation8 + $0x2f0] sm:$0xff]
    %v532 = vld [vmem:[#allocation8 + $0x2f8] sm:$0xff]
    %v533 = vld [vmem:[#allocation8 + $0x300] sm:$0xff]
    %v534 = vld [vmem:[#allocation8 + $0x308] sm:$0xff]
    %v535 = vld [vmem:[#allocation8 + $0x310] sm:$0xff]
    %v536 = vld [vmem:[#allocation8 + $0x318] sm:$0xff]
    %v537 = vld [vmem:[#allocation8 + $0x320] sm:$0xff]
    %v538 = vld [vmem:[#allocation8 + $0x328] sm:$0xff]
    %v539 = vld [vmem:[#allocation8 + $0x330] sm:$0xff]
    %v540 = vld [vmem:[#allocation8 + $0x338] sm:$0xff]
    %v541 = vld [vmem:[#allocation8 + $0x340] sm:$0xff]
    %v542 = vld [vmem:[#allocation8 + $0x348] sm:$0xff]
    %v543 = vld [vmem:[#allocation8 + $0x350] sm:$0xff]
    %v544 = vld [vmem:[#allocation8 + $0x358] sm:$0xff]
    %v545 = vld [vmem:[#allocation8 + $0x360] sm:$0xff]
    %v546 = vld [vmem:[#allocation8 + $0x368] sm:$0xff]
    %v547 = vld [vmem:[#allocation8 + $0x370] sm:$0xff]
    %v548 = vld [vmem:[#allocation8 + $0x378] sm:$0xff]
    %v549 = vld [vmem:[#allocation8 + $0x380] sm:$0xff]
    %v550 = vld [vmem:[#allocation8 + $0x388] sm:$0xff]
    %v551 = vld [vmem:[#allocation8 + $0x390] sm:$0xff]
    %v552 = vld [vmem:[#allocation8 + $0x398] sm:$0xff]
    %v553 = vld [vmem:[#allocation8 + $0x3a0] sm:$0xff]
    %v554 = vld [vmem:[#allocation8 + $0x3a8] sm:$0xff]
    %v555 = vld [vmem:[#allocation8 + $0x3b0] sm:$0xff]
    %v556 = vld [vmem:[#allocation8 + $0x3b8] sm:$0xff]
    %v557 = vld [vmem:[#allocation8 + $0x3c0] sm:$0xff]
    %v558 = vld [vmem:[#allocation8 + $0x3c8] sm:$0xff]
    %v559 = vld [vmem:[#allocation8 + $0x3d0] sm:$0xff]
    %v560 = vld [vmem:[#allocation8 + $0x3d8] sm:$0xff]
    %v561 = vld [vmem:[#allocation8 + $0x3e0] sm:$0xff]
    %v562 = vld [vmem:[#allocation8 + $0x3e8] sm:$0xff]
    %v563 = vld [vmem:[#allocation8 + $0x3f0] sm:$0xff]
    %v564 = vld [vmem:[#allocation8 + $0x3f8] sm:$0xff]
    %v565 = vld [vmem:[%s4] sm:$0x3]
    %v567 = vlaneseq
    %v568 = vshrl.u32 %v567, 7
    %v569 = vsub.s32 0, %v568
    %v570 = vrot.slane %v565, %v569
    %v571 = vlaneseq
    %v572 = vshrl.u32 %v571, 7
    %v573 = vsub.s32 1, %v572
    %v574 = vrot.slane %v565, %v573
    %v705 = vunpack.c.l.b16 %v437
    %v706 = vunpack.c.h.b16 %v437
    %v707 = vunpack.c.l.b16 %v438
    %v708 = vunpack.c.h.b16 %v438
    %v709 = vunpack.c.l.b16 %v439
    %v710 = vunpack.c.h.b16 %v439
    %v711 = vunpack.c.l.b16 %v440
    %v712 = vunpack.c.h.b16 %v440
    %v713 = vunpack.c.l.b16 %v441
    %v714 = vunpack.c.h.b16 %v441
    %v715 = vunpack.c.l.b16 %v442
    %v716 = vunpack.c.h.b16 %v442
    %v717 = vunpack.c.l.b16 %v443
    %v718 = vunpack.c.h.b16 %v443
    %v719 = vunpack.c.l.b16 %v444
    %v720 = vunpack.c.h.b16 %v444
    %v721 = vunpack.c.l.b16 %v445
    %v722 = vunpack.c.h.b16 %v445
    %v723 = vunpack.c.l.b16 %v446
    %v724 = vunpack.c.h.b16 %v446
    %v725 = vunpack.c.l.b16 %v447
    %v726 = vunpack.c.h.b16 %v447
    %v727 = vunpack.c.l.b16 %v448
    %v728 = vunpack.c.h.b16 %v448
    %v729 = vunpack.c.l.b16 %v449
    %v730 = vunpack.c.h.b16 %v449
    %v731 = vunpack.c.l.b16 %v450
    %v732 = vunpack.c.h.b16 %v450
    %v733 = vunpack.c.l.b16 %v451
    %v734 = vunpack.c.h.b16 %v451
    %v735 = vunpack.c.l.b16 %v452
    %v736 = vunpack.c.h.b16 %v452
    %v737 = vunpack.c.l.b16 %v453
    %v738 = vunpack.c.h.b16 %v453
    %v739 = vunpack.c.l.b16 %v454
    %v740 = vunpack.c.h.b16 %v454
    %v741 = vunpack.c.l.b16 %v455
    %v742 = vunpack.c.h.b16 %v455
    %v743 = vunpack.c.l.b16 %v456
    %v744 = vunpack.c.h.b16 %v456
    %v745 = vunpack.c.l.b16 %v457
    %v746 = vunpack.c.h.b16 %v457
    %v747 = vunpack.c.l.b16 %v458
    %v748 = vunpack.c.h.b16 %v458
    %v749 = vunpack.c.l.b16 %v459
    %v750 = vunpack.c.h.b16 %v459
    %v751 = vunpack.c.l.b16 %v460
    %v752 = vunpack.c.h.b16 %v460
    %v753 = vunpack.c.l.b16 %v461
    %v754 = vunpack.c.h.b16 %v461
    %v755 = vunpack.c.l.b16 %v462
    %v756 = vunpack.c.h.b16 %v462
    %v757 = vunpack.c.l.b16 %v463
    %v758 = vunpack.c.h.b16 %v463
    %v759 = vunpack.c.l.b16 %v464
    %v760 = vunpack.c.h.b16 %v464
    %v761 = vunpack.c.l.b16 %v465
    %v762 = vunpack.c.h.b16 %v465
    %v763 = vunpack.c.l.b16 %v466
    %v764 = vunpack.c.h.b16 %v466
    %v765 = vunpack.c.l.b16 %v467
    %v766 = vunpack.c.h.b16 %v467
    %v767 = vunpack.c.l.b16 %v468
    %v768 = vunpack.c.h.b16 %v468
    %v769 = vunpack.c.l.b16 %v469
    %v770 = vunpack.c.h.b16 %v469
    %v771 = vunpack.c.l.b16 %v470
    %v772 = vunpack.c.h.b16 %v470
    %v773 = vunpack.c.l.b16 %v471
    %v774 = vunpack.c.h.b16 %v471
    %v775 = vunpack.c.l.b16 %v472
    %v776 = vunpack.c.h.b16 %v472
    %v777 = vunpack.c.l.b16 %v473
    %v778 = vunpack.c.h.b16 %v473
    %v779 = vunpack.c.l.b16 %v474
    %v780 = vunpack.c.h.b16 %v474
    %v781 = vunpack.c.l.b16 %v475
    %v782 = vunpack.c.h.b16 %v475
    %v783 = vunpack.c.l.b16 %v476
    %v784 = vunpack.c.h.b16 %v476
    %v785 = vunpack.c.l.b16 %v477
    %v786 = vunpack.c.h.b16 %v477
    %v787 = vunpack.c.l.b16 %v478
    %v788 = vunpack.c.h.b16 %v478
    %v789 = vunpack.c.l.b16 %v479
    %v790 = vunpack.c.h.b16 %v479
    %v791 = vunpack.c.l.b16 %v480
    %v792 = vunpack.c.h.b16 %v480
    %v793 = vunpack.c.l.b16 %v481
    %v794 = vunpack.c.h.b16 %v481
    %v795 = vunpack.c.l.b16 %v482
    %v796 = vunpack.c.h.b16 %v482
    %v797 = vunpack.c.l.b16 %v483
    %v798 = vunpack.c.h.b16 %v483
    %v799 = vunpack.c.l.b16 %v484
    %v800 = vunpack.c.h.b16 %v484
    %v801 = vunpack.c.l.b16 %v485
    %v802 = vunpack.c.h.b16 %v485
    %v803 = vunpack.c.l.b16 %v486
    %v804 = vunpack.c.h.b16 %v486
    %v805 = vunpack.c.l.b16 %v487
    %v806 = vunpack.c.h.b16 %v487
    %v807 = vunpack.c.l.b16 %v488
    %v808 = vunpack.c.h.b16 %v488
    %v809 = vunpack.c.l.b16 %v489
    %v810 = vunpack.c.h.b16 %v489
    %v811 = vunpack.c.l.b16 %v490
    %v812 = vunpack.c.h.b16 %v490
    %v813 = vunpack.c.l.b16 %v491
    %v814 = vunpack.c.h.b16 %v491
    %v815 = vunpack.c.l.b16 %v492
    %v816 = vunpack.c.h.b16 %v492
    %v817 = vunpack.c.l.b16 %v493
    %v818 = vunpack.c.h.b16 %v493
    %v819 = vunpack.c.l.b16 %v494
    %v820 = vunpack.c.h.b16 %v494
    %v821 = vunpack.c.l.b16 %v495
    %v822 = vunpack.c.h.b16 %v495
    %v823 = vunpack.c.l.b16 %v496
    %v824 = vunpack.c.h.b16 %v496
    %v825 = vunpack.c.l.b16 %v497
    %v826 = vunpack.c.h.b16 %v497
    %v827 = vunpack.c.l.b16 %v498
    %v828 = vunpack.c.h.b16 %v498
    %v829 = vunpack.c.l.b16 %v499
    %v830 = vunpack.c.h.b16 %v499
    %v831 = vunpack.c.l.b16 %v500
    %v832 = vunpack.c.h.b16 %v500
    %v833 = vunpack.c.l.b16 %v501
    %v834 = vunpack.c.h.b16 %v501
    %v835 = vunpack.c.l.b16 %v502
    %v836 = vunpack.c.h.b16 %v502
    %v837 = vunpack.c.l.b16 %v503
    %v838 = vunpack.c.h.b16 %v503
    %v839 = vunpack.c.l.b16 %v504
    %v840 = vunpack.c.h.b16 %v504
    %v841 = vunpack.c.l.b16 %v505
    %v842 = vunpack.c.h.b16 %v505
    %v843 = vunpack.c.l.b16 %v506
    %v844 = vunpack.c.h.b16 %v506
    %v845 = vunpack.c.l.b16 %v507
    %v846 = vunpack.c.h.b16 %v507
    %v847 = vunpack.c.l.b16 %v508
    %v848 = vunpack.c.h.b16 %v508
    %v849 = vunpack.c.l.b16 %v509
    %v850 = vunpack.c.h.b16 %v509
    %v851 = vunpack.c.l.b16 %v510
    %v852 = vunpack.c.h.b16 %v510
    %v853 = vunpack.c.l.b16 %v511
    %v854 = vunpack.c.h.b16 %v511
    %v855 = vunpack.c.l.b16 %v512
    %v856 = vunpack.c.h.b16 %v512
    %v857 = vunpack.c.l.b16 %v513
    %v858 = vunpack.c.h.b16 %v513
    %v859 = vunpack.c.l.b16 %v514
    %v860 = vunpack.c.h.b16 %v514
    %v861 = vunpack.c.l.b16 %v515
    %v862 = vunpack.c.h.b16 %v515
    %v863 = vunpack.c.l.b16 %v516
    %v864 = vunpack.c.h.b16 %v516
    %v865 = vunpack.c.l.b16 %v517
    %v866 = vunpack.c.h.b16 %v517
    %v867 = vunpack.c.l.b16 %v518
    %v868 = vunpack.c.h.b16 %v518
    %v869 = vunpack.c.l.b16 %v519
    %v870 = vunpack.c.h.b16 %v519
    %v871 = vunpack.c.l.b16 %v520
    %v872 = vunpack.c.h.b16 %v520
    %v873 = vunpack.c.l.b16 %v521
    %v874 = vunpack.c.h.b16 %v521
    %v875 = vunpack.c.l.b16 %v522
    %v876 = vunpack.c.h.b16 %v522
    %v877 = vunpack.c.l.b16 %v523
    %v878 = vunpack.c.h.b16 %v523
    %v879 = vunpack.c.l.b16 %v524
    %v880 = vunpack.c.h.b16 %v524
    %v881 = vunpack.c.l.b16 %v525
    %v882 = vunpack.c.h.b16 %v525
    %v883 = vunpack.c.l.b16 %v526
    %v884 = vunpack.c.h.b16 %v526
    %v885 = vunpack.c.l.b16 %v527
    %v886 = vunpack.c.h.b16 %v527
    %v887 = vunpack.c.l.b16 %v528
    %v888 = vunpack.c.h.b16 %v528
    %v889 = vunpack.c.l.b16 %v529
    %v890 = vunpack.c.h.b16 %v529
    %v891 = vunpack.c.l.b16 %v530
    %v892 = vunpack.c.h.b16 %v530
    %v893 = vunpack.c.l.b16 %v531
    %v894 = vunpack.c.h.b16 %v531
    %v895 = vunpack.c.l.b16 %v532
    %v896 = vunpack.c.h.b16 %v532
    %v897 = vunpack.c.l.b16 %v533
    %v898 = vunpack.c.h.b16 %v533
    %v899 = vunpack.c.l.b16 %v534
    %v900 = vunpack.c.h.b16 %v534
    %v901 = vunpack.c.l.b16 %v535
    %v902 = vunpack.c.h.b16 %v535
    %v903 = vunpack.c.l.b16 %v536
    %v904 = vunpack.c.h.b16 %v536
    %v905 = vunpack.c.l.b16 %v537
    %v906 = vunpack.c.h.b16 %v537
    %v907 = vunpack.c.l.b16 %v538
    %v908 = vunpack.c.h.b16 %v538
    %v909 = vunpack.c.l.b16 %v539
    %v910 = vunpack.c.h.b16 %v539
    %v911 = vunpack.c.l.b16 %v540
    %v912 = vunpack.c.h.b16 %v540
    %v913 = vunpack.c.l.b16 %v541
    %v914 = vunpack.c.h.b16 %v541
    %v915 = vunpack.c.l.b16 %v542
    %v916 = vunpack.c.h.b16 %v542
    %v917 = vunpack.c.l.b16 %v543
    %v918 = vunpack.c.h.b16 %v543
    %v919 = vunpack.c.l.b16 %v544
    %v920 = vunpack.c.h.b16 %v544
    %v921 = vunpack.c.l.b16 %v545
    %v922 = vunpack.c.h.b16 %v545
    %v923 = vunpack.c.l.b16 %v546
    %v924 = vunpack.c.h.b16 %v546
    %v925 = vunpack.c.l.b16 %v547
    %v926 = vunpack.c.h.b16 %v547
    %v927 = vunpack.c.l.b16 %v548
    %v928 = vunpack.c.h.b16 %v548
    %v929 = vunpack.c.l.b16 %v549
    %v930 = vunpack.c.h.b16 %v549
    %v931 = vunpack.c.l.b16 %v550
    %v932 = vunpack.c.h.b16 %v550
    %v933 = vunpack.c.l.b16 %v551
    %v934 = vunpack.c.h.b16 %v551
    %v935 = vunpack.c.l.b16 %v552
    %v936 = vunpack.c.h.b16 %v552
    %v937 = vunpack.c.l.b16 %v553
    %v938 = vunpack.c.h.b16 %v553
    %v939 = vunpack.c.l.b16 %v554
    %v940 = vunpack.c.h.b16 %v554
    %v941 = vunpack.c.l.b16 %v555
    %v942 = vunpack.c.h.b16 %v555
    %v943 = vunpack.c.l.b16 %v556
    %v944 = vunpack.c.h.b16 %v556
    %v945 = vunpack.c.l.b16 %v557
    %v946 = vunpack.c.h.b16 %v557
    %v947 = vunpack.c.l.b16 %v558
    %v948 = vunpack.c.h.b16 %v558
    %v949 = vunpack.c.l.b16 %v559
    %v950 = vunpack.c.h.b16 %v559
    %v951 = vunpack.c.l.b16 %v560
    %v952 = vunpack.c.h.b16 %v560
    %v953 = vunpack.c.l.b16 %v561
    %v954 = vunpack.c.h.b16 %v561
    %v955 = vunpack.c.l.b16 %v562
    %v956 = vunpack.c.h.b16 %v562
    %v957 = vunpack.c.l.b16 %v563
    %v958 = vunpack.c.h.b16 %v563
    %v959 = vunpack.c.l.b16 %v564
    %v960 = vunpack.c.h.b16 %v564
    %v961 = vpack.c.b16 %v707, %v705
    %v962 = vpack.c.b16 %v708, %v706
    %v963 = vpack.c.b16 %v711, %v709
    %v964 = vpack.c.b16 %v712, %v710
    %v965 = vpack.c.b16 %v715, %v713
    %v966 = vpack.c.b16 %v716, %v714
    %v967 = vpack.c.b16 %v719, %v717
    %v968 = vpack.c.b16 %v720, %v718
    %v969 = vpack.c.b16 %v723, %v721
    %v970 = vpack.c.b16 %v724, %v722
    %v971 = vpack.c.b16 %v727, %v725
    %v972 = vpack.c.b16 %v728, %v726
    %v973 = vpack.c.b16 %v731, %v729
    %v974 = vpack.c.b16 %v732, %v730
    %v975 = vpack.c.b16 %v735, %v733
    %v976 = vpack.c.b16 %v736, %v734
    %v977 = vpack.c.b16 %v739, %v737
    %v978 = vpack.c.b16 %v740, %v738
    %v979 = vpack.c.b16 %v743, %v741
    %v980 = vpack.c.b16 %v744, %v742
    %v981 = vpack.c.b16 %v747, %v745
    %v982 = vpack.c.b16 %v748, %v746
    %v983 = vpack.c.b16 %v751, %v749
    %v984 = vpack.c.b16 %v752, %v750
    %v985 = vpack.c.b16 %v755, %v753
    %v986 = vpack.c.b16 %v756, %v754
    %v987 = vpack.c.b16 %v759, %v757
    %v988 = vpack.c.b16 %v760, %v758
    %v989 = vpack.c.b16 %v763, %v761
    %v990 = vpack.c.b16 %v764, %v762
    %v991 = vpack.c.b16 %v767, %v765
    %v992 = vpack.c.b16 %v768, %v766
    %v993 = vpack.c.b16 %v771, %v769
    %v994 = vpack.c.b16 %v772, %v770
    %v995 = vpack.c.b16 %v775, %v773
    %v996 = vpack.c.b16 %v776, %v774
    %v997 = vpack.c.b16 %v779, %v777
    %v998 = vpack.c.b16 %v780, %v778
    %v999 = vpack.c.b16 %v783, %v781
    %v1000 = vpack.c.b16 %v784, %v782
    %v1001 = vpack.c.b16 %v787, %v785
    %v1002 = vpack.c.b16 %v788, %v786
    %v1003 = vpack.c.b16 %v791, %v789
    %v1004 = vpack.c.b16 %v792, %v790
    %v1005 = vpack.c.b16 %v795, %v793
    %v1006 = vpack.c.b16 %v796, %v794
    %v1007 = vpack.c.b16 %v799, %v797
    %v1008 = vpack.c.b16 %v800, %v798
    %v1009 = vpack.c.b16 %v803, %v801
    %v1010 = vpack.c.b16 %v804, %v802
    %v1011 = vpack.c.b16 %v807, %v805
    %v1012 = vpack.c.b16 %v808, %v806
    %v1013 = vpack.c.b16 %v811, %v809
    %v1014 = vpack.c.b16 %v812, %v810
    %v1015 = vpack.c.b16 %v815, %v813
    %v1016 = vpack.c.b16 %v816, %v814
    %v1017 = vpack.c.b16 %v819, %v817
    %v1018 = vpack.c.b16 %v820, %v818
    %v1019 = vpack.c.b16 %v823, %v821
    %v1020 = vpack.c.b16 %v824, %v822
    %v1021 = vpack.c.b16 %v827, %v825
    %v1022 = vpack.c.b16 %v828, %v826
    %v1023 = vpack.c.b16 %v831, %v829
    %v1024 = vpack.c.b16 %v832, %v830
    %v1025 = vpack.c.b16 %v835, %v833
    %v1026 = vpack.c.b16 %v836, %v834
    %v1027 = vpack.c.b16 %v839, %v837
    %v1028 = vpack.c.b16 %v840, %v838
    %v1029 = vpack.c.b16 %v843, %v841
    %v1030 = vpack.c.b16 %v844, %v842
    %v1031 = vpack.c.b16 %v847, %v845
    %v1032 = vpack.c.b16 %v848, %v846
    %v1033 = vpack.c.b16 %v851, %v849
    %v1034 = vpack.c.b16 %v852, %v850
    %v1035 = vpack.c.b16 %v855, %v853
    %v1036 = vpack.c.b16 %v856, %v854
    %v1037 = vpack.c.b16 %v859, %v857
    %v1038 = vpack.c.b16 %v860, %v858
    %v1039 = vpack.c.b16 %v863, %v861
    %v1040 = vpack.c.b16 %v864, %v862
    %v1041 = vpack.c.b16 %v867, %v865
    %v1042 = vpack.c.b16 %v868, %v866
    %v1043 = vpack.c.b16 %v871, %v869
    %v1044 = vpack.c.b16 %v872, %v870
    %v1045 = vpack.c.b16 %v875, %v873
    %v1046 = vpack.c.b16 %v876, %v874
    %v1047 = vpack.c.b16 %v879, %v877
    %v1048 = vpack.c.b16 %v880, %v878
    %v1049 = vpack.c.b16 %v883, %v881
    %v1050 = vpack.c.b16 %v884, %v882
    %v1051 = vpack.c.b16 %v887, %v885
    %v1052 = vpack.c.b16 %v888, %v886
    %v1053 = vpack.c.b16 %v891, %v889
    %v1054 = vpack.c.b16 %v892, %v890
    %v1055 = vpack.c.b16 %v895, %v893
    %v1056 = vpack.c.b16 %v896, %v894
    %v1057 = vpack.c.b16 %v899, %v897
    %v1058 = vpack.c.b16 %v900, %v898
    %v1059 = vpack.c.b16 %v903, %v901
    %v1060 = vpack.c.b16 %v904, %v902
    %v1061 = vpack.c.b16 %v907, %v905
    %v1062 = vpack.c.b16 %v908, %v906
    %v1063 = vpack.c.b16 %v911, %v909
    %v1064 = vpack.c.b16 %v912, %v910
    %v1065 = vpack.c.b16 %v915, %v913
    %v1066 = vpack.c.b16 %v916, %v914
    %v1067 = vpack.c.b16 %v919, %v917
    %v1068 = vpack.c.b16 %v920, %v918
    %v1069 = vpack.c.b16 %v923, %v921
    %v1070 = vpack.c.b16 %v924, %v922
    %v1071 = vpack.c.b16 %v927, %v925
    %v1072 = vpack.c.b16 %v928, %v926
    %v1073 = vpack.c.b16 %v931, %v929
    %v1074 = vpack.c.b16 %v932, %v930
    %v1075 = vpack.c.b16 %v935, %v933
    %v1076 = vpack.c.b16 %v936, %v934
    %v1077 = vpack.c.b16 %v939, %v937
    %v1078 = vpack.c.b16 %v940, %v938
    %v1079 = vpack.c.b16 %v943, %v941
    %v1080 = vpack.c.b16 %v944, %v942
    %v1081 = vpack.c.b16 %v947, %v945
    %v1082 = vpack.c.b16 %v948, %v946
    %v1083 = vpack.c.b16 %v951, %v949
    %v1084 = vpack.c.b16 %v952, %v950
    %v1085 = vpack.c.b16 %v955, %v953
    %v1086 = vpack.c.b16 %v956, %v954
    %v1087 = vpack.c.b16 %v959, %v957
    %v1088 = vpack.c.b16 %v960, %v958
    %1217 = vmatprep.subr.bf16.mxu0 %v976
    %1218 = vmatpush1.bf16.msra.mxu0 %v975
    %1219 = vmatprep.subr.bf16.mxu0 %v974
    %1220 = vmatpush1.bf16.msra.mxu0 %v973
    %1221 = vmatprep.subr.bf16.mxu0 %v972
    %1222 = vmatpush1.bf16.msra.mxu0 %v971
    %1223 = vmatprep.subr.bf16.mxu0 %v970
    %1224 = vmatpush1.bf16.msra.mxu0 %v969
    %1225 = vmatprep.subr.bf16.mxu0 %v968
    %1226 = vmatpush1.bf16.msra.mxu0 %v967
    %1227 = vmatprep.subr.bf16.mxu0 %v966
    %1228 = vmatpush1.bf16.msra.mxu0 %v965
    %1229 = vmatprep.subr.bf16.mxu0 %v964
    %1230 = vmatpush1.bf16.msra.mxu0 %v963
    %1231 = vmatprep.subr.bf16.mxu0 %v962
    %1232 = vmatpush1.bf16.msra.mxu0 %v961
    %1233 = vmatprep.subr.bf16.mxu0 %v992
    %1234 = vmatpush2.bf16.msra.mxu0 %v991
    %1235 = vmatprep.subr.bf16.mxu0 %v990
    %1236 = vmatpush2.bf16.msra.mxu0 %v989
    %1237 = vmatprep.subr.bf16.mxu0 %v988
    %1238 = vmatpush2.bf16.msra.mxu0 %v987
    %1239 = vmatprep.subr.bf16.mxu0 %v986
    %1240 = vmatpush2.bf16.msra.mxu0 %v985
    %1241 = vmatprep.subr.bf16.mxu0 %v984
    %1242 = vmatpush2.bf16.msra.mxu0 %v983
    %1243 = vmatprep.subr.bf16.mxu0 %v982
    %1244 = vmatpush2.bf16.msra.mxu0 %v981
    %1245 = vmatprep.subr.bf16.mxu0 %v980
    %1246 = vmatpush2.bf16.msra.mxu0 %v979
    %1247 = vmatprep.subr.bf16.mxu0 %v978
    %1248 = vmatpush2.bf16.msra.mxu0 %v977
    %1249 = vmatprep.mubr.bf16.mxu0 %v430
    %1250 = vmatmul.mubr.bf16.gmra.mxu0 %v429
    %v1251 = vpop.f32.mrf.mxu0
    %v1252 = vadd.f32 %v570, %v1251
    %v1253 = vpop.f32.mrf.mxu0
    %v1254 = vadd.f32 %v574, %v1253
    %v1255 = vpop.f32.mrf.mxu0
    %v1256 = vpop.f32.mrf.mxu0
    %1257 = vdwg.mxu0
    %1258 = vmatprep.subr.bf16.mxu0 %v1008
    %1259 = vmatpush1.bf16.msra.mxu0 %v1007
    %1260 = vmatprep.subr.bf16.mxu0 %v1006
    %1261 = vmatpush1.bf16.msra.mxu0 %v1005
    %1262 = vmatprep.subr.bf16.mxu0 %v1004
    %1263 = vmatpush1.bf16.msra.mxu0 %v1003
    %1264 = vmatprep.subr.bf16.mxu0 %v1002
    %1265 = vmatpush1.bf16.msra.mxu0 %v1001
    %1266 = vmatprep.subr.bf16.mxu0 %v1000
    %1267 = vmatpush1.bf16.msra.mxu0 %v999
    %1268 = vmatprep.subr.bf16.mxu0 %v998
    %1269 = vmatpush1.bf16.msra.mxu0 %v997
    %1270 = vmatprep.subr.bf16.mxu0 %v996
    %1271 = vmatpush1.bf16.msra.mxu0 %v995
    %1272 = vmatprep.subr.bf16.mxu0 %v994
    %1273 = vmatpush1.bf16.msra.mxu0 %v993
    %1274 = vmatprep.subr.bf16.mxu0 %v1024
    %1275 = vmatpush2.bf16.msra.mxu0 %v1023
    %1276 = vmatprep.subr.bf16.mxu0 %v1022
    %1277 = vmatpush2.bf16.msra.mxu0 %v1021
    %1278 = vmatprep.subr.bf16.mxu0 %v1020
    %1279 = vmatpush2.bf16.msra.mxu0 %v1019
    %1280 = vmatprep.subr.bf16.mxu0 %v1018
    %1281 = vmatpush2.bf16.msra.mxu0 %v1017
    %1282 = vmatprep.subr.bf16.mxu0 %v1016
    %1283 = vmatpush2.bf16.msra.mxu0 %v1015
    %1284 = vmatprep.subr.bf16.mxu0 %v1014
    %1285 = vmatpush2.bf16.msra.mxu0 %v1013
    %1286 = vmatprep.subr.bf16.mxu0 %v1012
    %1287 = vmatpush2.bf16.msra.mxu0 %v1011
    %1288 = vmatprep.subr.bf16.mxu0 %v1010
    %1289 = vmatpush2.bf16.msra.mxu0 %v1009
    %1290 = vmatprep.mubr.bf16.mxu0 %v432
    %1291 = vmatmul.mubr.bf16.gmra.mxu0 %v431
    %v1292 = vpop.f32.mrf.mxu0
    %v1293 = vadd.f32 %v1252, %v1292
    %v1294 = vpop.f32.mrf.mxu0
    %v1295 = vadd.f32 %v1254, %v1294
    %v1296 = vpop.f32.mrf.mxu0
    %v1297 = vpop.f32.mrf.mxu0
    %1298 = vdwg.mxu0
    %1299 = vmatprep.subr.bf16.mxu0 %v1040
    %1300 = vmatpush1.bf16.msra.mxu0 %v1039
    %1301 = vmatprep.subr.bf16.mxu0 %v1038
    %1302 = vmatpush1.bf16.msra.mxu0 %v1037
    %1303 = vmatprep.subr.bf16.mxu0 %v1036
    %1304 = vmatpush1.bf16.msra.mxu0 %v1035
    %1305 = vmatprep.subr.bf16.mxu0 %v1034
    %1306 = vmatpush1.bf16.msra.mxu0 %v1033
    %1307 = vmatprep.subr.bf16.mxu0 %v1032
    %1308 = vmatpush1.bf16.msra.mxu0 %v1031
    %1309 = vmatprep.subr.bf16.mxu0 %v1030
    %1310 = vmatpush1.bf16.msra.mxu0 %v1029
    %1311 = vmatprep.subr.bf16.mxu0 %v1028
    %1312 = vmatpush1.bf16.msra.mxu0 %v1027
    %1313 = vmatprep.subr.bf16.mxu0 %v1026
    %1314 = vmatpush1.bf16.msra.mxu0 %v1025
    %1315 = vmatprep.subr.bf16.mxu0 %v1056
    %1316 = vmatpush2.bf16.msra.mxu0 %v1055
    %1317 = vmatprep.subr.bf16.mxu0 %v1054
    %1318 = vmatpush2.bf16.msra.mxu0 %v1053
    %1319 = vmatprep.subr.bf16.mxu0 %v1052
    %1320 = vmatpush2.bf16.msra.mxu0 %v1051
    %1321 = vmatprep.subr.bf16.mxu0 %v1050
    %1322 = vmatpush2.bf16.msra.mxu0 %v1049
    %1323 = vmatprep.subr.bf16.mxu0 %v1048
    %1324 = vmatpush2.bf16.msra.mxu0 %v1047
    %1325 = vmatprep.subr.bf16.mxu0 %v1046
    %1326 = vmatpush2.bf16.msra.mxu0 %v1045
    %1327 = vmatprep.subr.bf16.mxu0 %v1044
    %1328 = vmatpush2.bf16.msra.mxu0 %v1043
    %1329 = vmatprep.subr.bf16.mxu0 %v1042
    %1330 = vmatpush2.bf16.msra.mxu0 %v1041
    %1331 = vmatprep.mubr.bf16.mxu0 %v434
    %1332 = vmatmul.mubr.bf16.gmra.mxu0 %v433
    %v1333 = vpop.f32.mrf.mxu0
    %v1334 = vadd.f32 %v1293, %v1333
    %v1335 = vpop.f32.mrf.mxu0
    %v1336 = vadd.f32 %v1295, %v1335
    %v1337 = vpop.f32.mrf.mxu0
    %v1338 = vpop.f32.mrf.mxu0
    %1339 = vdwg.mxu0
    %1340 = vmatprep.subr.bf16.mxu0 %v1072
    %1341 = vmatpush1.bf16.msra.mxu0 %v1071
    %1342 = vmatprep.subr.bf16.mxu0 %v1070
    %1343 = vmatpush1.bf16.msra.mxu0 %v1069
    %1344 = vmatprep.subr.bf16.mxu0 %v1068
    %1345 = vmatpush1.bf16.msra.mxu0 %v1067
    %1346 = vmatprep.subr.bf16.mxu0 %v1066
    %1347 = vmatpush1.bf16.msra.mxu0 %v1065
    %1348 = vmatprep.subr.bf16.mxu0 %v1064
    %1349 = vmatpush1.bf16.msra.mxu0 %v1063
    %1350 = vmatprep.subr.bf16.mxu0 %v1062
    %1351 = vmatpush1.bf16.msra.mxu0 %v1061
    %1352 = vmatprep.subr.bf16.mxu0 %v1060
    %1353 = vmatpush1.bf16.msra.mxu0 %v1059
    %1354 = vmatprep.subr.bf16.mxu0 %v1058
    %1355 = vmatpush1.bf16.msra.mxu0 %v1057
    %1356 = vmatprep.subr.bf16.mxu0 %v1088
    %1357 = vmatpush2.bf16.msra.mxu0 %v1087
    %1358 = vmatprep.subr.bf16.mxu0 %v1086
    %1359 = vmatpush2.bf16.msra.mxu0 %v1085
    %1360 = vmatprep.subr.bf16.mxu0 %v1084
    %1361 = vmatpush2.bf16.msra.mxu0 %v1083
    %1362 = vmatprep.subr.bf16.mxu0 %v1082
    %1363 = vmatpush2.bf16.msra.mxu0 %v1081
    %1364 = vmatprep.subr.bf16.mxu0 %v1080
    %1365 = vmatpush2.bf16.msra.mxu0 %v1079
    %1366 = vmatprep.subr.bf16.mxu0 %v1078
    %1367 = vmatpush2.bf16.msra.mxu0 %v1077
    %1368 = vmatprep.subr.bf16.mxu0 %v1076
    %1369 = vmatpush2.bf16.msra.mxu0 %v1075
    %1370 = vmatprep.subr.bf16.mxu0 %v1074
    %1371 = vmatpush2.bf16.msra.mxu0 %v1073
    %1372 = vmatprep.mubr.bf16.mxu0 %v436
    %1373 = vmatmul.mubr.bf16.gmra.mxu0 %v435
    %v1374 = vpop.f32.mrf.mxu0
    %v1375 = vadd.f32 %v1334, %v1374
    %v1376 = vpop.f32.mrf.mxu0
    %v1377 = vadd.f32 %v1336, %v1376
    %v1378 = vpop.f32.mrf.mxu0
    %v1379 = vpop.f32.mrf.mxu0
    %1380 = vdwg.mxu0
    %v1381 = vxor.u32 %v1375, 2147483648
    %v1382 = vxor.u32 %v1377, 2147483648
    %v1383 = vmul.f32 %v1381, 1.442695
    %v1384 = vpow.pop %v1383
    %v1385 = vmul.f32 %v1382, 1.442695
    %v1386 = vpow.pop %v1385
    %v1387 = vadd.f32 %v1384, 1.0
    %v1388 = vadd.f32 %v1386, 1.0
    %v1389 = vrcp.pop %v1387
    %v1390 = vmul.f32 1.0, %v1389
    %v1391 = vrcp.pop %v1388
    %v1392 = vmul.f32 1.0, %v1391
    %1393 = vst [vmem:[#allocation10] sm:$0xff] %v1390
    %1394 = vst [vmem:[#allocation10 + $0x8] sm:$0xff] %v1392
    // Predicated region
    $region38: #{tpu_custom_call.1} parent=1 // pred_check
      _
    $region39: #{tpu_custom_call.1} parent=1 // pred_check_branch
      %1396 = sbr.rel (0) target = $region41
    $region40: #{tpu_custom_call.1} parent=1 // pred_region
      %s1398 = ssub.s32 256, 256
      %1399 = vsyncadd [#allocation4], %s1398
      %s1401 = sshll.u32 [#allocation10], 4
      %s1402 = int_to_ptr.vmem [resolvable:$true] %s1401
      %1404 = dma.vmem_to_hbm [thread:$0]  %s1402, 256, %s5, [#allocation4]
    $region41: #{tpu_custom_call.1} parent=1 // pred_fallthru
      _
    // Predicated region
    $region42: #{tpu_custom_call.1} parent=1 // pred_check
      _
    $region43: #{tpu_custom_call.1} parent=1 // pred_check_branch
      %1406 = sbr.rel (0) target = $region45
    $region44: #{tpu_custom_call.1} parent=1 // pred_region
      %1407 = dma.done [#allocation4], 256
    $region45: #{tpu_custom_call.1} parent=1 // pred_fallthru
      _
    %1408 = vsyncpa [#allocation3], 1
    %1409 = vsyncpa [#allocation6], 1
    %1410 = vsyncpa [#allocation9], 1
    %1411 = vsyncpa [#allocation4], 1

</llo_original>
